<compile_context>
chip_gen: v5e
topology: v5e:2x2
jax: 0.10.0
libtpu: 0.0.40
codegen_flags: <defaults>
</compile_context>

<pallas_src>
import functools

import jax
import jax.numpy as jnp
from jax.experimental import pallas as pl
from jax.experimental.pallas import tpu as pltpu


def _round_up(x, m):
    return ((x + m - 1) // m) * m


def _posterior_kernel(phi_ref, h_ref,
                      w1a_ref, w1b_ref, b1_ref,
                      w2_ref, b2_ref,
                      wh_ref, bh_ref,
                      out_ref, *, z_dim):
    # In-kernel bf16 cast (activations cross HBM once, as f32).
    phi16 = phi_ref[...].astype(jnp.bfloat16)
    h16 = h_ref[...].astype(jnp.bfloat16)

    # ---- post_encoder layer 1: split-K replaces the wrapper concat --------
    e1 = (jnp.dot(phi16, w1a_ref[...], preferred_element_type=jnp.float32)
          + jnp.dot(h16, w1b_ref[...], preferred_element_type=jnp.float32)
          + b1_ref[...])
    e1 = jnp.maximum(e1, 0.0).astype(jnp.bfloat16)

    # ---- post_encoder layer 2 ---------------------------------------------
    e2 = jnp.dot(e1, w2_ref[...], preferred_element_type=jnp.float32) + b2_ref[...]
    e2 = jnp.maximum(e2, 0.0).astype(jnp.bfloat16)

    # ---- fused heads: one lane-dense matmul + one lane-dense bf16 store ---
    #   lanes [0:z_dim)          -> relu      (post_mean)
    #   lanes [z_dim:2*z_dim)    -> softplus  (post_std)
    #   lanes [2*z_dim:head_pad) -> padding (softplus(0)=ln2; sliced away)
    hd = (jnp.dot(e2, wh_ref[...], preferred_element_type=jnp.float32)
          + bh_ref[...]).astype(jnp.bfloat16)      # bf16 epilogue (EUP on v6e/v7x)
    relu_b = jnp.maximum(hd, 0.0)
    # Numerically stable softplus using only exp/log (Mosaic-native EUP ops):
    # softplus(x) = max(x, 0) + log(1 + exp(-|x|))
    softplus_b = relu_b + jnp.log(1.0 + jnp.exp(-jnp.abs(hd)))
    lane = jax.lax.broadcasted_iota(jnp.int32, hd.shape, 1)
    out_ref[...] = jnp.where(lane < z_dim, relu_b, softplus_b).astype(out_ref.dtype)


def pack_params(params, z_dim):
    """One-time (init-time) repack: split W1, fuse + lane-pad the heads, pad the
    hidden width to 128 lanes, cast matmul operands to bf16."""
    two_h, post_hid_dim = params["w1"].shape
    h_dim = two_h // 2
    hid_pad = _round_up(post_hid_dim, 128)        # lane-dense hidden width
    head_pad = _round_up(max(2 * z_dim, 128), 128)  # lane-dense fused-head width

    def pad_to(a, rows, cols):
        return jnp.pad(a, ((0, rows - a.shape[0]), (0, cols - a.shape[1])))

    wh = jnp.concatenate([params["wm"], params["ws"]], axis=1)   # fused heads
    bh = jnp.concatenate([params["bm"], params["bs"]], axis=1)

    return dict(
        w1a=pad_to(params["w1"][:h_dim], h_dim, hid_pad).astype(jnp.bfloat16),
        w1b=pad_to(params["w1"][h_dim:], h_dim, hid_pad).astype(jnp.bfloat16),
        b1=pad_to(params["b1"], 1, hid_pad).astype(jnp.float32),
        w2=pad_to(params["w2"], hid_pad, hid_pad).astype(jnp.bfloat16),
        b2=pad_to(params["b2"], 1, hid_pad).astype(jnp.float32),
        wh=pad_to(wh, hid_pad, head_pad).astype(jnp.bfloat16),
        bh=pad_to(bh, 1, head_pad).astype(jnp.float32),
        z_dim=z_dim,
        head_pad=head_pad,
    )


def posterior_forward_fused(phi_x_t, h, packed, *, max_tile=1024):
    """phi_x_t, h: [N, h_dim] float32.

    Returns the fused bf16 slab [N, head_pad]:
      [:, :z_dim]        = post_mean
      [:, z_dim:2*z_dim] = post_std
      [:, 2*z_dim:]      = padding (do not consume)
    Heavy consumers should slice this slab inside their own fusion rather than
    forcing a separate slice pass.
    """
    z_dim = packed["z_dim"]
    head_pad = packed["head_pad"]
    hid_pad = packed["w2"].shape[0]
    N, h_dim = phi_x_t.shape

    # Batch tile: bf16-output-friendly sublane multiple (16), and >=2 grid
    # steps whenever N allows so the "parallel" axis shards across both
    # TensorCores on v7x. Capped at 1024 rows (tile footprint ~ a few MiB).
    if N <= 16:
        tm = N                                        # single full block
    else:
        tm = min(max_tile, _round_up(pl.cdiv(N, 2), 16))
    grid = (pl.cdiv(N, tm),)                          # ragged last block: masked stores

    def row_spec(width):                              # activation tiles
        return pl.BlockSpec((tm, width), lambda i: (i, 0))

    def res_spec(a):                                  # weights: VMEM-resident
        return pl.BlockSpec(a.shape, lambda i: (0, 0))

    # VMEM budget from the actual tile footprint (double-buffered tiles + slack).
    est = (2 * 2 * tm * h_dim * 4                     # phi + h tiles (f32, x2 buf)
           + 2 * tm * head_pad * 2                    # output tile (bf16, x2 buf)
           + 2 * 2 * (packed["w1a"].size + packed["w1b"].size
                      + packed["w2"].size + packed["wh"].size)        # bf16 weights
           + 2 * 4 * (packed["b1"].size + packed["b2"].size + packed["bh"].size)
           + 3 * tm * hid_pad * 4 + 2 * tm * head_pad * 4)            # live temps
    vmem_limit = int(min(64 * 1024 * 1024, max(16 * 1024 * 1024, 2 * est)))

    kernel = functools.partial(_posterior_kernel, z_dim=z_dim)

    out = pl.pallas_call(
        kernel,
        out_shape=jax.ShapeDtypeStruct((N, head_pad), jnp.bfloat16),
        grid=grid,
        in_specs=[row_spec(h_dim), row_spec(h_dim),
                  res_spec(packed["w1a"]), res_spec(packed["w1b"]), res_spec(packed["b1"]),
                  res_spec(packed["w2"]), res_spec(packed["b2"]),
                  res_spec(packed["wh"]), res_spec(packed["bh"])],
        out_specs=pl.BlockSpec((tm, head_pad), lambda i: (i, 0)),
        compiler_params=pltpu.CompilerParams(
            dimension_semantics=("parallel",),        # shard batch axis across TCs
            vmem_limit_bytes=vmem_limit,
        ),
    )(phi_x_t, h,
      packed["w1a"], packed["w1b"], packed["b1"],
      packed["w2"], packed["b2"],
      packed["wh"], packed["bh"])
    return out


def posterior_forward(phi_x_t, h, packed):
    """Module-faithful API: returns (post_mean, post_std) as [N, z_dim] float32."""
    z_dim = packed["z_dim"]
    out = posterior_forward_fused(phi_x_t, h, packed)
    post_mean = out[:, :z_dim].astype(jnp.float32)
    post_std = out[:, z_dim:2 * z_dim].astype(jnp.float32)
    return post_mean, post_std


def init_params(key, h_dim, post_hid_dim, z_dim):
    """Deterministic synthetic init (uniform, like torch.nn.Linear default)."""
    def linear(k, fan_in, fan_out):
        kw, kb = jax.random.split(k)
        bound = 1.0 / jnp.sqrt(fan_in)
        w = jax.random.uniform(kw, (fan_in, fan_out), jnp.float32, -bound, bound)
        b = jax.random.uniform(kb, (1, fan_out), jnp.float32, -bound, bound)
        return w, b

    k1, k2, k3, k4 = jax.random.split(key, 4)
    w1, b1 = linear(k1, 2 * h_dim, post_hid_dim)
    w2, b2 = linear(k2, post_hid_dim, post_hid_dim)
    wm, bm = linear(k3, post_hid_dim, z_dim)
    ws, bs = linear(k4, post_hid_dim, z_dim)
    return dict(w1=w1, b1=b1, w2=w2, b2=b2, wm=wm, bm=bm, ws=ws, bs=bs)


if __name__ == "__main__":
    # Small shapes consistent with the module's forward.
    N, h_dim, post_hid_dim, z_dim = 8, 32, 64, 16

    key = jax.random.PRNGKey(0)
    kp, kx, kh = jax.random.split(key, 3)

    params = init_params(kp, h_dim, post_hid_dim, z_dim)
    packed = pack_params(params, z_dim)           # one-time repack (not per call)

    phi_x_t = jax.random.normal(kx, (N, h_dim), jnp.float32)
    h = jax.random.normal(kh, (N, h_dim), jnp.float32)

    post_mean, post_std = posterior_forward(phi_x_t, h, packed)
    jax.block_until_ready((post_mean, post_std))

    # Reference in plain JAX with the same bf16-operand / f32-accumulate scheme.
    def reference(phi, hh):
        bf = lambda a: a.astype(jnp.bfloat16).astype(jnp.float32)
        x = jnp.concatenate([phi, hh], axis=1)
        e = jax.nn.relu(bf(x) @ bf(params["w1"]) + params["b1"])
        e = jax.nn.relu(bf(e) @ bf(params["w2"]) + params["b2"])
        rm = jax.nn.relu(bf(e) @ bf(params["wm"]) + params["bm"])
        rs = jax.nn.softplus(bf(e) @ bf(params["ws"]) + params["bs"])
        return rm, rs

    ref_mean, ref_std = reference(phi_x_t, h)
    assert post_mean.shape == (N, z_dim) and post_std.shape == (N, z_dim)
    assert jnp.allclose(post_mean, ref_mean, atol=2e-2, rtol=2e-2)
    assert jnp.allclose(post_std, ref_std, atol=2e-2, rtol=2e-2)
    assert bool(jnp.all(post_std > 0.0))

    # Exercise the multi-block / ragged-batch / two-TC ("parallel") path too.
    N2 = 200
    kx2, kh2 = jax.random.split(jax.random.PRNGKey(1))
    phi2 = jax.random.normal(kx2, (N2, h_dim), jnp.float32)
    h2 = jax.random.normal(kh2, (N2, h_dim), jnp.float32)
    m2, s2 = posterior_forward(phi2, h2, packed)
    jax.block_until_ready((m2, s2))
    rm2, rs2 = reference(phi2, h2)
    assert m2.shape == (N2, z_dim) and s2.shape == (N2, z_dim)
    assert jnp.allclose(m2, rm2, atol=2e-2, rtol=2e-2)
    assert jnp.allclose(s2, rs2, atol=2e-2, rtol=2e-2)

    print("KERNEL_OK")
</pallas_src>

<mosaic_0001>
module attributes {stable_mosaic.version = 11 : i64} {
  func.func @_posterior_kernel(%arg0: i32, %arg1: memref<8x32xf32, #tpu.memory_space<vmem>>, %arg2: memref<8x32xf32, #tpu.memory_space<vmem>>, %arg3: memref<32x128xbf16, #tpu.memory_space<vmem>>, %arg4: memref<32x128xbf16, #tpu.memory_space<vmem>>, %arg5: memref<1x128xf32, #tpu.memory_space<vmem>>, %arg6: memref<128x128xbf16, #tpu.memory_space<vmem>>, %arg7: memref<1x128xf32, #tpu.memory_space<vmem>>, %arg8: memref<128x128xbf16, #tpu.memory_space<vmem>>, %arg9: memref<1x128xf32, #tpu.memory_space<vmem>>, %arg10: memref<8x128xbf16, #tpu.memory_space<vmem>>) attributes {dimension_semantics = [#tpu.dimension_semantics<parallel>], iteration_bounds = array<i64: 1>, scalar_prefetch = 0 : i64, scratch_operands = 0 : i64, tpu.core_type = #tpu.core_type<tc>, window_params = [{transform_indices = @transform_0, window_bounds = array<i64: 8, 32>}, {transform_indices = @transform_1, window_bounds = array<i64: 8, 32>}, {pipeline_mode = #tpu.pipeline_mode<synchronous>, transform_indices = @transform_2, window_bounds = array<i64: 32, 128>}, {pipeline_mode = #tpu.pipeline_mode<synchronous>, transform_indices = @transform_3, window_bounds = array<i64: 32, 128>}, {pipeline_mode = #tpu.pipeline_mode<synchronous>, transform_indices = @transform_4, window_bounds = array<i64: 1, 128>}, {pipeline_mode = #tpu.pipeline_mode<synchronous>, transform_indices = @transform_5, window_bounds = array<i64: 128, 128>}, {pipeline_mode = #tpu.pipeline_mode<synchronous>, transform_indices = @transform_6, window_bounds = array<i64: 1, 128>}, {pipeline_mode = #tpu.pipeline_mode<synchronous>, transform_indices = @transform_7, window_bounds = array<i64: 128, 128>}, {pipeline_mode = #tpu.pipeline_mode<synchronous>, transform_indices = @transform_8, window_bounds = array<i64: 1, 128>}, {transform_indices = @transform_9, window_bounds = array<i64: 8, 128>}]} {
    %c0 = arith.constant 0 : index
    %c0_0 = arith.constant 0 : index
    %0 = vector.load %arg1[%c0, %c0_0] : memref<8x32xf32, #tpu.memory_space<vmem>>, vector<8x32xf32>
    %1 = arith.truncf %0 : vector<8x32xf32> to vector<8x32xbf16>
    %c0_1 = arith.constant 0 : index
    %c0_2 = arith.constant 0 : index
    %2 = vector.load %arg2[%c0_1, %c0_2] : memref<8x32xf32, #tpu.memory_space<vmem>>, vector<8x32xf32>
    %3 = arith.truncf %2 : vector<8x32xf32> to vector<8x32xbf16>
    %c0_3 = arith.constant 0 : index
    %c0_4 = arith.constant 0 : index
    %4 = vector.load %arg3[%c0_3, %c0_4] : memref<32x128xbf16, #tpu.memory_space<vmem>>, vector<32x128xbf16>
    %cst = arith.constant dense<0.000000e+00> : vector<8x128xf32>
    %5 = tpu.matmul %1, %4, %cst {dimension_numbers = #tpu.dot_dimension_numbers<[1], [0], [0], [1], [0, 0, 1, 1], [], []>} : vector<8x32xbf16>, vector<32x128xbf16>, vector<8x128xf32> -> vector<8x128xf32>
    %c0_5 = arith.constant 0 : index
    %c0_6 = arith.constant 0 : index
    %6 = vector.load %arg4[%c0_5, %c0_6] : memref<32x128xbf16, #tpu.memory_space<vmem>>, vector<32x128xbf16>
    %cst_7 = arith.constant dense<0.000000e+00> : vector<8x128xf32>
    %7 = tpu.matmul %3, %6, %cst_7 {dimension_numbers = #tpu.dot_dimension_numbers<[1], [0], [0], [1], [0, 0, 1, 1], [], []>} : vector<8x32xbf16>, vector<32x128xbf16>, vector<8x128xf32> -> vector<8x128xf32>
    %8 = arith.addf %5, %7 : vector<8x128xf32>
    %c0_8 = arith.constant 0 : index
    %c0_9 = arith.constant 0 : index
    %9 = vector.load %arg5[%c0_8, %c0_9] : memref<1x128xf32, #tpu.memory_space<vmem>>, vector<1x128xf32>
    %10 = vector.broadcast %9 : vector<1x128xf32> to vector<8x128xf32>
    %11 = arith.addf %8, %10 : vector<8x128xf32>
    %cst_10 = arith.constant 0.000000e+00 : f32
    %12 = vector.broadcast %cst_10 : f32 to vector<8x128xf32>
    %13 = arith.maximumf %11, %12 : vector<8x128xf32>
    %14 = arith.truncf %13 : vector<8x128xf32> to vector<8x128xbf16>
    %c0_11 = arith.constant 0 : index
    %c0_12 = arith.constant 0 : index
    %15 = vector.load %arg6[%c0_11, %c0_12] : memref<128x128xbf16, #tpu.memory_space<vmem>>, vector<128x128xbf16>
    %cst_13 = arith.constant dense<0.000000e+00> : vector<8x128xf32>
    %16 = tpu.matmul %14, %15, %cst_13 {dimension_numbers = #tpu.dot_dimension_numbers<[1], [0], [0], [1], [0, 0, 1, 1], [], []>} : vector<8x128xbf16>, vector<128x128xbf16>, vector<8x128xf32> -> vector<8x128xf32>
    %c0_14 = arith.constant 0 : index
    %c0_15 = arith.constant 0 : index
    %17 = vector.load %arg7[%c0_14, %c0_15] : memref<1x128xf32, #tpu.memory_space<vmem>>, vector<1x128xf32>
    %18 = vector.broadcast %17 : vector<1x128xf32> to vector<8x128xf32>
    %19 = arith.addf %16, %18 : vector<8x128xf32>
    %cst_16 = arith.constant 0.000000e+00 : f32
    %20 = vector.broadcast %cst_16 : f32 to vector<8x128xf32>
    %21 = arith.maximumf %19, %20 : vector<8x128xf32>
    %22 = arith.truncf %21 : vector<8x128xf32> to vector<8x128xbf16>
    %c0_17 = arith.constant 0 : index
    %c0_18 = arith.constant 0 : index
    %23 = vector.load %arg8[%c0_17, %c0_18] : memref<128x128xbf16, #tpu.memory_space<vmem>>, vector<128x128xbf16>
    %cst_19 = arith.constant dense<0.000000e+00> : vector<8x128xf32>
    %24 = tpu.matmul %22, %23, %cst_19 {dimension_numbers = #tpu.dot_dimension_numbers<[1], [0], [0], [1], [0, 0, 1, 1], [], []>} : vector<8x128xbf16>, vector<128x128xbf16>, vector<8x128xf32> -> vector<8x128xf32>
    %c0_20 = arith.constant 0 : index
    %c0_21 = arith.constant 0 : index
    %25 = vector.load %arg9[%c0_20, %c0_21] : memref<1x128xf32, #tpu.memory_space<vmem>>, vector<1x128xf32>
    %26 = vector.broadcast %25 : vector<1x128xf32> to vector<8x128xf32>
    %27 = arith.addf %24, %26 : vector<8x128xf32>
    %28 = arith.truncf %27 : vector<8x128xf32> to vector<8x128xbf16>
    %cst_22 = arith.constant 0.000000e+00 : bf16
    %29 = vector.broadcast %cst_22 : bf16 to vector<8x128xbf16>
    %30 = arith.maximumf %28, %29 : vector<8x128xbf16>
    %31 = math.absf %28 : vector<8x128xbf16>
    %cst_23 = arith.constant 0.000000e+00 : bf16
    %32 = vector.broadcast %cst_23 : bf16 to vector<8x128xbf16>
    %33 = arith.subf %32, %31 : vector<8x128xbf16>
    %34 = math.exp %33 : vector<8x128xbf16>
    %cst_24 = arith.constant 1.000000e+00 : bf16
    %35 = vector.broadcast %cst_24 : bf16 to vector<8x128xbf16>
    %36 = arith.addf %35, %34 : vector<8x128xbf16>
    %37 = math.log %36 : vector<8x128xbf16>
    %38 = arith.addf %30, %37 : vector<8x128xbf16>
    %39 = tpu.iota {dimensions = array<i32: 1>} : vector<8x128xi32>
    %c16_i32 = arith.constant 16 : i32
    %40 = vector.broadcast %c16_i32 : i32 to vector<8x128xi32>
    %41 = arith.cmpi slt, %39, %40 : vector<8x128xi32>
    %42 = arith.select %41, %30, %38 : vector<8x128xi1>, vector<8x128xbf16>
    %c0_25 = arith.constant 0 : index
    %c0_26 = arith.constant 0 : index
    %43 = vector.load %arg10[%c0_25, %c0_26] : memref<8x128xbf16, #tpu.memory_space<vmem>>, vector<8x128xbf16>
    tpu.vector_store %arg10[%c0_25, %c0_26], %42 {strides = array<i32>} : memref<8x128xbf16, #tpu.memory_space<vmem>>, vector<8x128xbf16>,
    return
  }
  func.func @transform_0(%arg0: i32) -> (i32, i32) {
    %c0_i32 = arith.constant 0 : i32
    %c0_i32_0 = arith.constant 0 : i32
    return %arg0, %c0_i32 : i32, i32
  }
  func.func @transform_1(%arg0: i32) -> (i32, i32) {
    %c0_i32 = arith.constant 0 : i32
    %c0_i32_0 = arith.constant 0 : i32
    return %arg0, %c0_i32 : i32, i32
  }
  func.func @transform_2(%arg0: i32) -> (i32, i32) {
    %c0_i32 = arith.constant 0 : i32
    %c0_i32_0 = arith.constant 0 : i32
    %c0_i32_1 = arith.constant 0 : i32
    return %c0_i32, %c0_i32_0 : i32, i32
  }
  func.func @transform_3(%arg0: i32) -> (i32, i32) {
    %c0_i32 = arith.constant 0 : i32
    %c0_i32_0 = arith.constant 0 : i32
    %c0_i32_1 = arith.constant 0 : i32
    return %c0_i32, %c0_i32_0 : i32, i32
  }
  func.func @transform_4(%arg0: i32) -> (i32, i32) {
    %c0_i32 = arith.constant 0 : i32
    %c0_i32_0 = arith.constant 0 : i32
    %c0_i32_1 = arith.constant 0 : i32
    return %c0_i32, %c0_i32_0 : i32, i32
  }
  func.func @transform_5(%arg0: i32) -> (i32, i32) {
    %c0_i32 = arith.constant 0 : i32
    %c0_i32_0 = arith.constant 0 : i32
    %c0_i32_1 = arith.constant 0 : i32
    return %c0_i32, %c0_i32_0 : i32, i32
  }
  func.func @transform_6(%arg0: i32) -> (i32, i32) {
    %c0_i32 = arith.constant 0 : i32
    %c0_i32_0 = arith.constant 0 : i32
    %c0_i32_1 = arith.constant 0 : i32
    return %c0_i32, %c0_i32_0 : i32, i32
  }
  func.func @transform_7(%arg0: i32) -> (i32, i32) {
    %c0_i32 = arith.constant 0 : i32
    %c0_i32_0 = arith.constant 0 : i32
    %c0_i32_1 = arith.constant 0 : i32
    return %c0_i32, %c0_i32_0 : i32, i32
  }
  func.func @transform_8(%arg0: i32) -> (i32, i32) {
    %c0_i32 = arith.constant 0 : i32
    %c0_i32_0 = arith.constant 0 : i32
    %c0_i32_1 = arith.constant 0 : i32
    return %c0_i32, %c0_i32_0 : i32, i32
  }
  func.func @transform_9(%arg0: i32) -> (i32, i32) {
    %c0_i32 = arith.constant 0 : i32
    %c0_i32_0 = arith.constant 0 : i32
    return %arg0, %c0_i32 : i32, i32
  }
}

</mosaic_0001>

<llo_original>
// kernel: tpu_custom_call.1
$region0: #{tpu_custom_call.1}
  #allocation0 [shape = 'u32[]', space=smem, size = 0x4, offset = 0x4, fixed_abs, tag = 'smem constant byte address 0x4 - core index']
  #allocation1 [shape = 'u32[72,128]{1,0:T(1,128)}', space=vmem, size = 0x9000, scoped, tag = 'internal scratch']
  %s0 = inlined_call_operand.hbm [shape: f32[8,32], index: 0, kind: input, shape index: {}]
  %s1 = inlined_call_operand.hbm [shape: f32[8,32], index: 1, kind: input, shape index: {}]
  %s2 = inlined_call_operand.hbm [shape: bf16[32,128], index: 2, kind: input, shape index: {}]
  %s3 = inlined_call_operand.hbm [shape: bf16[32,128], index: 3, kind: input, shape index: {}]
  %s4 = inlined_call_operand.vmem [shape: f32[1,128], index: 4, kind: input, shape index: {}]
  %s5 = inlined_call_operand.hbm [shape: bf16[128,128], index: 5, kind: input, shape index: {}]
  %s6 = inlined_call_operand.vmem [shape: f32[1,128], index: 6, kind: input, shape index: {}]
  %s7 = inlined_call_operand.hbm [shape: bf16[128,128], index: 7, kind: input, shape index: {}]
  %s8 = inlined_call_operand.vmem [shape: f32[1,128], index: 8, kind: input, shape index: {}]
  %s9 = inlined_call_operand.hbm [shape: bf16[8,128], index: 9, kind: output, shape index: {}]
  %s10 = sld [smem:[#allocation0]]
  $region70: #{tpu_custom_call.1} parent=0
    _
  %s12 = ssub.s32 1, %s10
  %s13 = scalar_select 0, %s12, %s10
  $region1: #{tpu_custom_call.1} parent=0
    #allocation2 [shape = 'u8[4096]{0}', space=vmem, size = 0x1000, scoped, tag = 'input window, operand 0, single buffered']
    #allocation3 [shape = 's32[1]{0}', space=sflag, size = 0x4, scoped, tag = 'scoped memory for tpu_custom_call.1']
    #allocation4 [shape = 's32[1]{0}', space=sflag, size = 0x4, scoped, tag = 'scoped memory for tpu_custom_call.1']
    #allocation5 [shape = 'u8[4096]{0}', space=vmem, size = 0x1000, scoped, tag = 'input window, operand 1, single buffered']
    #allocation6 [shape = 's32[1]{0}', space=sflag, size = 0x4, scoped, tag = 'scoped memory for tpu_custom_call.1']
    #allocation7 [shape = 'u8[8192]{0}', space=vmem, size = 0x2000, scoped, tag = 'input window, operand 2, single buffered']
    #allocation8 [shape = 'u8[8192]{0}', space=vmem, size = 0x2000, scoped, tag = 'input window, operand 3, single buffered']
    #allocation9 [shape = 's32[1]{0}', space=sflag, size = 0x4, scoped, tag = 'scoped memory for tpu_custom_call.1']
    #allocation10 [shape = 'u8[32768]{0}', space=vmem, size = 0x8000, scoped, tag = 'input window, operand 5, single buffered']
    #allocation11 [shape = 'u8[32768]{0}', space=vmem, size = 0x8000, scoped, tag = 'input window, operand 7, single buffered']
    #allocation12 [shape = 's32[1]{0}', space=sflag, size = 0x4, scoped, tag = 'scoped memory for tpu_custom_call.1']
    #allocation13 [shape = 'u8[2048]{0}', space=vmem, size = 0x800, scoped, tag = 'output window, operand 0, single buffered']
    %14 = vsyncpa [#allocation3], 0
    %15 = vsyncpa [#allocation6], 0
    %16 = vsyncpa [#allocation9], 0
    %17 = vsyncpa [#allocation12], 0
    %18 = vsyncpa [#allocation4], 0
    // Predicated region
    $region2: #{tpu_custom_call.1} parent=1 // pred_check
      _
    $region3: #{tpu_custom_call.1} parent=1 // pred_check_branch
      %20 = sbr.rel (0) target = $region5
    $region4: #{tpu_custom_call.1} parent=1 // pred_region
      %22 = vsyncadd [#allocation3], 0
      %s24 = sshll.u32 %s0, 4
      %s25 = int_to_ptr.hbm [resolvable:$true] %s24
      %s26 = sshll.u32 [#allocation2], 4
      %s27 = int_to_ptr.vmem [resolvable:$true] %s26
      %29 = dma.hbm_to_vmem [thread:$0]  %s25, 128, %s27, [#allocation3]
    $region5: #{tpu_custom_call.1} parent=1 // pred_fallthru
      _
    // Predicated region
    $region6: #{tpu_custom_call.1} parent=1 // pred_check
      _
    $region7: #{tpu_custom_call.1} parent=1 // pred_check_branch
      %31 = sbr.rel (0) target = $region9
    $region8: #{tpu_custom_call.1} parent=1 // pred_region
      %33 = vsyncadd [#allocation6], 0
      %s35 = sshll.u32 %s1, 4
      %s36 = int_to_ptr.hbm [resolvable:$true] %s35
      %s37 = sshll.u32 [#allocation5], 4
      %s38 = int_to_ptr.vmem [resolvable:$true] %s37
      %40 = dma.hbm_to_vmem [thread:$0]  %s36, 128, %s38, [#allocation6]
    $region9: #{tpu_custom_call.1} parent=1 // pred_fallthru
      _
    // Predicated region
    $region10: #{tpu_custom_call.1} parent=1 // pred_check
      _
    $region11: #{tpu_custom_call.1} parent=1 // pred_check_branch
      %42 = sbr.rel (0) target = $region13
    $region12: #{tpu_custom_call.1} parent=1 // pred_region
      %44 = vsyncadd [#allocation6], 0
      %s45 = sshll.u32 %s2, 4
      %s46 = int_to_ptr.hbm [resolvable:$true] %s45
      %s47 = sshll.u32 [#allocation7], 4
      %s48 = int_to_ptr.vmem [resolvable:$true] %s47
      %53 = dma.hbm_to_vmem [thread:$0]  %s46, 256, %s48, [#allocation6], 64, 64, 4
    $region13: #{tpu_custom_call.1} parent=1 // pred_fallthru
      _
    // Predicated region
    $region14: #{tpu_custom_call.1} parent=1 // pred_check
      _
    $region15: #{tpu_custom_call.1} parent=1 // pred_check_branch
      %55 = sbr.rel (0) target = $region17
    $region16: #{tpu_custom_call.1} parent=1 // pred_region
      %57 = vsyncadd [#allocation9], 0
      %s58 = sshll.u32 %s3, 4
      %s59 = int_to_ptr.hbm [resolvable:$true] %s58
      %s60 = sshll.u32 [#allocation8], 4
      %s61 = int_to_ptr.vmem [resolvable:$true] %s60
      %66 = dma.hbm_to_vmem [thread:$0]  %s59, 256, %s61, [#allocation9], 64, 64, 4
    $region17: #{tpu_custom_call.1} parent=1 // pred_fallthru
      _
    // Predicated region
    $region18: #{tpu_custom_call.1} parent=1 // pred_check
      _
    $region19: #{tpu_custom_call.1} parent=1 // pred_check_branch
      %68 = sbr.rel (0) target = $region21
    $region20: #{tpu_custom_call.1} parent=1 // pred_region
      _
    $region21: #{tpu_custom_call.1} parent=1 // pred_fallthru
      _
    // Predicated region
    $region22: #{tpu_custom_call.1} parent=1 // pred_check
      _
    $region23: #{tpu_custom_call.1} parent=1 // pred_check_branch
      %70 = sbr.rel (0) target = $region25
    $region24: #{tpu_custom_call.1} parent=1 // pred_region
      %72 = vsyncadd [#allocation9], 0
      %s73 = sshll.u32 %s5, 4
      %s74 = int_to_ptr.hbm [resolvable:$true] %s73
      %s75 = sshll.u32 [#allocation10], 4
      %s76 = int_to_ptr.vmem [resolvable:$true] %s75
      %81 = dma.hbm_to_vmem [thread:$0]  %s74, 1024, %s76, [#allocation9], 64, 64, 4
    $region25: #{tpu_custom_call.1} parent=1 // pred_fallthru
      _
    // Predicated region
    $region26: #{tpu_custom_call.1} parent=1 // pred_check
      _
    $region27: #{tpu_custom_call.1} parent=1 // pred_check_branch
      %83 = sbr.rel (0) target = $region29
    $region28: #{tpu_custom_call.1} parent=1 // pred_region
      _
    $region29: #{tpu_custom_call.1} parent=1 // pred_fallthru
      _
    // Predicated region
    $region30: #{tpu_custom_call.1} parent=1 // pred_check
      _
    $region31: #{tpu_custom_call.1} parent=1 // pred_check_branch
      %85 = sbr.rel (0) target = $region33
    $region32: #{tpu_custom_call.1} parent=1 // pred_region
      %87 = vsyncadd [#allocation12], 0
      %s88 = sshll.u32 %s7, 4
      %s89 = int_to_ptr.hbm [resolvable:$true] %s88
      %s90 = sshll.u32 [#allocation11], 4
      %s91 = int_to_ptr.vmem [resolvable:$true] %s90
      %96 = dma.hbm_to_vmem [thread:$0]  %s89, 1024, %s91, [#allocation12], 64, 64, 4
    $region33: #{tpu_custom_call.1} parent=1 // pred_fallthru
      _
    // Predicated region
    $region34: #{tpu_custom_call.1} parent=1 // pred_check
      _
    $region35: #{tpu_custom_call.1} parent=1 // pred_check_branch
      %98 = sbr.rel (0) target = $region37
    $region36: #{tpu_custom_call.1} parent=1 // pred_region
      _
    $region37: #{tpu_custom_call.1} parent=1 // pred_fallthru
      _
    // Predicated region
    $region38: #{tpu_custom_call.1} parent=1 // pred_check
      _
    $region39: #{tpu_custom_call.1} parent=1 // pred_check_branch
      %100 = sbr.rel (0) target = $region41
    $region40: #{tpu_custom_call.1} parent=1 // pred_region
      %102 = dma.done [#allocation3], 128
    $region41: #{tpu_custom_call.1} parent=1 // pred_fallthru
      _
    // Predicated region
    $region42: #{tpu_custom_call.1} parent=1 // pred_check
      _
    $region43: #{tpu_custom_call.1} parent=1 // pred_check_branch
      %104 = sbr.rel (0) target = $region45
    $region44: #{tpu_custom_call.1} parent=1 // pred_region
      %106 = dma.done [#allocation6], 128
    $region45: #{tpu_custom_call.1} parent=1 // pred_fallthru
      _
    // Predicated region
    $region46: #{tpu_custom_call.1} parent=1 // pred_check
      _
    $region47: #{tpu_custom_call.1} parent=1 // pred_check_branch
      %108 = sbr.rel (0) target = $region49
    $region48: #{tpu_custom_call.1} parent=1 // pred_region
      %110 = dma.done [#allocation6], 256
    $region49: #{tpu_custom_call.1} parent=1 // pred_fallthru
      _
    // Predicated region
    $region50: #{tpu_custom_call.1} parent=1 // pred_check
      _
    $region51: #{tpu_custom_call.1} parent=1 // pred_check_branch
      %112 = sbr.rel (0) target = $region53
    $region52: #{tpu_custom_call.1} parent=1 // pred_region
      %114 = dma.done [#allocation9], 256
    $region53: #{tpu_custom_call.1} parent=1 // pred_fallthru
      _
    // Predicated region
    $region54: #{tpu_custom_call.1} parent=1 // pred_check
      _
    $region55: #{tpu_custom_call.1} parent=1 // pred_check_branch
      %116 = sbr.rel (0) target = $region57
    $region56: #{tpu_custom_call.1} parent=1 // pred_region
      %118 = dma.done [#allocation9], 1024
    $region57: #{tpu_custom_call.1} parent=1 // pred_fallthru
      _
    // Predicated region
    $region58: #{tpu_custom_call.1} parent=1 // pred_check
      _
    $region59: #{tpu_custom_call.1} parent=1 // pred_check_branch
      %120 = sbr.rel (0) target = $region61
    $region60: #{tpu_custom_call.1} parent=1 // pred_region
      %122 = dma.done [#allocation12], 1024
    $region61: #{tpu_custom_call.1} parent=1 // pred_fallthru
      _
    %v124 = vld [vmem:[#allocation2] sm:$0xff]
    %v125 = vpack.c.bf16 %v124, %v124
    %v126 = vld [vmem:[#allocation5] sm:$0xff]
    %v127 = vpack.c.bf16 %v126, %v126
    %v128 = vld [vmem:[#allocation7] sm:$0xf]
    %v129 = vld [vmem:[#allocation7 + $0x4] sm:$0xf]
    %v130 = vld [vmem:[#allocation7 + $0x8] sm:$0xf]
    %v131 = vld [vmem:[#allocation7 + $0xc] sm:$0xf]
    %v132 = vld [vmem:[#allocation8] sm:$0xf]
    %v133 = vld [vmem:[#allocation8 + $0x4] sm:$0xf]
    %v134 = vld [vmem:[#allocation8 + $0x8] sm:$0xf]
    %v135 = vld [vmem:[#allocation8 + $0xc] sm:$0xf]
    %v140 = vunpack.c.l.b16 %v132
    %v141 = vunpack.c.l.b16 %v133
    %v142 = vunpack.c.l.b16 %v134
    %v143 = vunpack.c.l.b16 %v135
    %v144 = vpack.c.b16 %v141, %v140
    %v145 = vpack.c.b16 %v143, %v142
    %vm148 = vcmask 261120
    %v150 = vsel %vm148, %v127, 0
    %152 = vmatpush.bf16.msra.mxu0 0
    %153 = vmatpush.bf16.msra.mxu0 0
    %154 = vmatpush.bf16.msra.mxu0 0
    %155 = vmatpush.bf16.msra.mxu0 0
    %156 = vmatpush.bf16.msra.mxu0 0
    %157 = vmatpush.bf16.msra.mxu0 0
    %158 = vmatpush.bf16.msra.mxu0 %v145
    %159 = vmatpush.bf16.msra.mxu0 %v144
    %160 = vmatmul.bf16.gmra.mxu0 %v150
    %v161 = vpop.f32.mrf.mxu0
    %v162 = vadd.f32 0.0, %v161
    %v163 = vpop.f32.mrf.mxu0
    %164 = vdwg.mxu0
    %v169 = vunpack.c.l.b16 %v128
    %v170 = vunpack.c.l.b16 %v129
    %v171 = vunpack.c.l.b16 %v130
    %v172 = vunpack.c.l.b16 %v131
    %v173 = vpack.c.b16 %v170, %v169
    %v174 = vpack.c.b16 %v172, %v171
    %v178 = vsel %vm148, %v125, 0
    %180 = vmatpush.bf16.msra.mxu0 0
    %181 = vmatpush.bf16.msra.mxu0 0
    %182 = vmatpush.bf16.msra.mxu0 0
    %183 = vmatpush.bf16.msra.mxu0 0
    %184 = vmatpush.bf16.msra.mxu0 0
    %185 = vmatpush.bf16.msra.mxu0 0
    %186 = vmatpush.bf16.msra.mxu0 %v174
    %187 = vmatpush.bf16.msra.mxu0 %v173
    %188 = vmatmul.bf16.gmra.mxu0 %v178
    %v189 = vpop.f32.mrf.mxu0
    %v190 = vadd.f32 %v162, %v189
    %v191 = vpop.f32.mrf.mxu0
    %192 = vdwg.mxu0
    %v193 = vld [vmem:[%s4] sm:$0x1]
    %v195 = vperm.slane %v193, 0
    %v197 = vadd.f32 %v190, %v195
    %v198 = vmax.f32 %v197, 0.0
    %v199 = vpack.c.bf16 %v198, %v198
    %v200 = vld [vmem:[#allocation10] sm:$0xf]
    %v201 = vld [vmem:[#allocation10 + $0x4] sm:$0xf]
    %v202 = vld [vmem:[#allocation10 + $0x8] sm:$0xf]
    %v203 = vld [vmem:[#allocation10 + $0xc] sm:$0xf]
    %v204 = vld [vmem:[#allocation10 + $0x10] sm:$0xf]
    %v205 = vld [vmem:[#allocation10 + $0x14] sm:$0xf]
    %v206 = vld [vmem:[#allocation10 + $0x18] sm:$0xf]
    %v207 = vld [vmem:[#allocation10 + $0x1c] sm:$0xf]
    %v208 = vld [vmem:[#allocation10 + $0x20] sm:$0xf]
    %v209 = vld [vmem:[#allocation10 + $0x24] sm:$0xf]
    %v210 = vld [vmem:[#allocation10 + $0x28] sm:$0xf]
    %v211 = vld [vmem:[#allocation10 + $0x2c] sm:$0xf]
    %v212 = vld [vmem:[#allocation10 + $0x30] sm:$0xf]
    %v213 = vld [vmem:[#allocation10 + $0x34] sm:$0xf]
    %v214 = vld [vmem:[#allocation10 + $0x38] sm:$0xf]
    %v215 = vld [vmem:[#allocation10 + $0x3c] sm:$0xf]
    %v216 = vld [vmem:[%s6] sm:$0x1]
    %v218 = vperm.slane %v216, 0
    %v236 = vunpack.c.l.b16 %v200
    %v237 = vunpack.c.l.b16 %v201
    %v238 = vunpack.c.l.b16 %v202
    %v239 = vunpack.c.l.b16 %v203
    %v240 = vunpack.c.l.b16 %v204
    %v241 = vunpack.c.l.b16 %v205
    %v242 = vunpack.c.l.b16 %v206
    %v243 = vunpack.c.l.b16 %v207
    %v244 = vunpack.c.l.b16 %v208
    %v245 = vunpack.c.l.b16 %v209
    %v246 = vunpack.c.l.b16 %v210
    %v247 = vunpack.c.l.b16 %v211
    %v248 = vunpack.c.l.b16 %v212
    %v249 = vunpack.c.l.b16 %v213
    %v250 = vunpack.c.l.b16 %v214
    %v251 = vunpack.c.l.b16 %v215
    %v252 = vpack.c.b16 %v237, %v236
    %v253 = vpack.c.b16 %v239, %v238
    %v254 = vpack.c.b16 %v241, %v240
    %v255 = vpack.c.b16 %v243, %v242
    %v256 = vpack.c.b16 %v245, %v244
    %v257 = vpack.c.b16 %v247, %v246
    %v258 = vpack.c.b16 %v249, %v248
    %v259 = vpack.c.b16 %v251, %v250
    %268 = vmatpush.bf16.msra.mxu0 %v259
    %269 = vmatpush.bf16.msra.mxu0 %v258
    %270 = vmatpush.bf16.msra.mxu0 %v257
    %271 = vmatpush.bf16.msra.mxu0 %v256
    %272 = vmatpush.bf16.msra.mxu0 %v255
    %273 = vmatpush.bf16.msra.mxu0 %v254
    %274 = vmatpush.bf16.msra.mxu0 %v253
    %275 = vmatpush.bf16.msra.mxu0 %v252
    %276 = vmatmul.bf16.gmra.mxu0 %v199
    %v277 = vpop.f32.mrf.mxu0
    %v278 = vadd.f32 %v218, %v277
    %v279 = vpop.f32.mrf.mxu0
    %280 = vdwg.mxu0
    %v281 = vmax.f32 %v278, 0.0
    %v282 = vpack.c.bf16 %v281, %v281
    %v283 = vld [vmem:[#allocation11] sm:$0xf]
    %v284 = vld [vmem:[#allocation11 + $0x4] sm:$0xf]
    %v285 = vld [vmem:[#allocation11 + $0x8] sm:$0xf]
    %v286 = vld [vmem:[#allocation11 + $0xc] sm:$0xf]
    %v287 = vld [vmem:[#allocation11 + $0x10] sm:$0xf]
    %v288 = vld [vmem:[#allocation11 + $0x14] sm:$0xf]
    %v289 = vld [vmem:[#allocation11 + $0x18] sm:$0xf]
    %v290 = vld [vmem:[#allocation11 + $0x1c] sm:$0xf]
    %v291 = vld [vmem:[#allocation11 + $0x20] sm:$0xf]
    %v292 = vld [vmem:[#allocation11 + $0x24] sm:$0xf]
    %v293 = vld [vmem:[#allocation11 + $0x28] sm:$0xf]
    %v294 = vld [vmem:[#allocation11 + $0x2c] sm:$0xf]
    %v295 = vld [vmem:[#allocation11 + $0x30] sm:$0xf]
    %v296 = vld [vmem:[#allocation11 + $0x34] sm:$0xf]
    %v297 = vld [vmem:[#allocation11 + $0x38] sm:$0xf]
    %v298 = vld [vmem:[#allocation11 + $0x3c] sm:$0xf]
    %v299 = vld [vmem:[%s8] sm:$0x1]
    %v301 = vperm.slane %v299, 0
    %v319 = vunpack.c.l.b16 %v283
    %v320 = vunpack.c.l.b16 %v284
    %v321 = vunpack.c.l.b16 %v285
    %v322 = vunpack.c.l.b16 %v286
    %v323 = vunpack.c.l.b16 %v287
    %v324 = vunpack.c.l.b16 %v288
    %v325 = vunpack.c.l.b16 %v289
    %v326 = vunpack.c.l.b16 %v290
    %v327 = vunpack.c.l.b16 %v291
    %v328 = vunpack.c.l.b16 %v292
    %v329 = vunpack.c.l.b16 %v293
    %v330 = vunpack.c.l.b16 %v294
    %v331 = vunpack.c.l.b16 %v295
    %v332 = vunpack.c.l.b16 %v296
    %v333 = vunpack.c.l.b16 %v297
    %v334 = vunpack.c.l.b16 %v298
    %v335 = vpack.c.b16 %v320, %v319
    %v336 = vpack.c.b16 %v322, %v321
    %v337 = vpack.c.b16 %v324, %v323
    %v338 = vpack.c.b16 %v326, %v325
    %v339 = vpack.c.b16 %v328, %v327
    %v340 = vpack.c.b16 %v330, %v329
    %v341 = vpack.c.b16 %v332, %v331
    %v342 = vpack.c.b16 %v334, %v333
    %351 = vmatpush.bf16.msra.mxu0 %v342
    %352 = vmatpush.bf16.msra.mxu0 %v341
    %353 = vmatpush.bf16.msra.mxu0 %v340
    %354 = vmatpush.bf16.msra.mxu0 %v339
    %355 = vmatpush.bf16.msra.mxu0 %v338
    %356 = vmatpush.bf16.msra.mxu0 %v337
    %357 = vmatpush.bf16.msra.mxu0 %v336
    %358 = vmatpush.bf16.msra.mxu0 %v335
    %359 = vmatmul.bf16.gmra.mxu0 %v282
    %v360 = vpop.f32.mrf.mxu0
    %v361 = vadd.f32 %v301, %v360
    %v362 = vpop.f32.mrf.mxu0
    %363 = vdwg.mxu0
    %v364 = vpack.c.bf16 %v361, %v361
    %v365 = vunpack.c.l.bf16 %v364
    %v366 = vmax.f32 %v365, 0.0
    %v367 = vpack.c.bf16 %v366, %v366
    %v368 = vand.u32 2147450879, %v364
    %v369 = vunpack.c.l.bf16 %v368
    %v370 = vsub.f32 0.0, %v369
    %v371 = vpack.c.bf16 %v370, %v370
    %v372 = vunpack.c.l.bf16 %v371
    %v373 = vmul.f32 %v372, 1.442695
    %v374 = vpow.pop %v373
    %v375 = vpack.c.bf16 %v374, %v374
    %v376 = vunpack.c.l.bf16 %v375
    %v377 = vadd.f32 %v376, 1.0
    %v378 = vpack.c.bf16 %v377, %v377
    %v379 = vunpack.c.l.bf16 %v378
    %v380 = vlog2.pop %v379
    %v381 = vmul.f32 %v380, 0.6931472
    %v382 = vpack.c.bf16 %v381, %v381
    %v383 = vunpack.c.l.bf16 %v367
    %v384 = vunpack.c.l.bf16 %v382
    %v385 = vadd.f32 %v383, %v384
    %v386 = vpack.c.bf16 %v385, %v385
    %v387 = vlaneseq
    %v388 = vand.u32 %v387, 127
    %vm389 = vcmp.lt.s32.totalorder %v388, 16
    %vm390 = vmpackc.low %vm389, %vm389
    %v391 = vsel %vm390, %v367, %v386
    %392 = vst [vmem:[#allocation13] sm:$0xf] %v391
    // Predicated region
    $region62: #{tpu_custom_call.1} parent=1 // pred_check
      _
    $region63: #{tpu_custom_call.1} parent=1 // pred_check_branch
      %394 = sbr.rel (0) target = $region65
    $region64: #{tpu_custom_call.1} parent=1 // pred_region
      %396 = vsyncadd [#allocation4], 0
      %s398 = sshll.u32 [#allocation13], 4
      %s399 = int_to_ptr.vmem [resolvable:$true] %s398
      %s400 = sshll.u32 %s9, 4
      %s401 = int_to_ptr.hbm [resolvable:$true] %s400
      %403 = dma.vmem_to_hbm [thread:$0]  %s399, 64, %s401, [#allocation4]
    $region65: #{tpu_custom_call.1} parent=1 // pred_fallthru
      _
    // Predicated region
    $region66: #{tpu_custom_call.1} parent=1 // pred_check
      _
    $region67: #{tpu_custom_call.1} parent=1 // pred_check_branch
      %405 = sbr.rel (0) target = $region69
    $region68: #{tpu_custom_call.1} parent=1 // pred_region
      %407 = dma.done [#allocation4], 64
    $region69: #{tpu_custom_call.1} parent=1 // pred_fallthru
      _
    %408 = vsyncpa [#allocation3], 1
    %409 = vsyncpa [#allocation6], 1
    %410 = vsyncpa [#allocation9], 1
    %411 = vsyncpa [#allocation12], 1
    %412 = vsyncpa [#allocation4], 1

</llo_original>
